<compile_context>
chip_gen: v6e
topology: v6e:2x2x1
jax: 0.10.0
libtpu: 0.0.40
codegen_flags: <defaults>
</compile_context>

<pallas_src>
import jax
import jax.numpy as jnp
from jax.experimental import pallas as pl
from jax.experimental.pallas import tpu as pltpu


def _round_up(x, m):
    return ((x + m - 1) // m) * m


def _clamp_vmem(nbytes):
    # generous headroom, floor 32 MiB, cap well under v5e/v6e physical VMEM
    return int(min(max(nbytes * 1.5 + (8 << 20), 32 << 20), 100 << 20))


# ---------------------------------------------------------------------------
# Generic tiled matmul + per-column bias:  (M, K) @ (K, N) + b  ->  (M, N) f32
# Used for (a) the batched layer-0 input projection over all Sp*Bp rows and
# (b) the batched dense vocab head over all Bp*S rows (N tiled along lanes).
# ---------------------------------------------------------------------------
def _matmul_bias_kernel(a_ref, w_ref, b_ref, o_ref):
    o_ref[...] = (
        jnp.dot(a_ref[...], w_ref[...], preferred_element_type=jnp.float32)
        + b_ref[...]
    ).astype(o_ref.dtype)


def matmul_bias(a, w, b):
    """(M, K) @ (K, N) + b.  Requires M % 8 == 0 and N % 128 == 0."""
    M, K = a.shape
    K2, N = w.shape
    assert K == K2
    tn = next((c for c in (512, 256, 128) if N % c == 0), N)
    # Largest row tile that fits a conservative VMEM budget (cuts the number
    # of times the (K, N) weight is re-streamed from HBM for the vocab head).
    budget = 40 << 20
    tm = 8 if M % 8 == 0 else M
    for c in (2048, 1024, 512, 256, 128, 64, 32, 16, 8):
        if M % c == 0 and 2 * (c * K + K * tn + c * tn + tn) * 4 <= budget:
            tm = c
            break
    vmem_limit = _clamp_vmem(2 * (tm * K + K * tn + tm * tn + tn) * 4)
    return pl.pallas_call(
        _matmul_bias_kernel,
        out_shape=jax.ShapeDtypeStruct((M, N), jnp.float32),
        grid_spec=pltpu.PrefetchScalarGridSpec(
            num_scalar_prefetch=0,
            grid=(M // tm, N // tn),
            in_specs=[
                pl.BlockSpec((tm, K), lambda i, j: (i, 0)),
                pl.BlockSpec((K, tn), lambda i, j: (0, j)),
                pl.BlockSpec((1, tn), lambda i, j: (0, j)),
            ],
            out_specs=pl.BlockSpec((tm, tn), lambda i, j: (i, j)),
        ),
        compiler_params=pltpu.CompilerParams(
            dimension_semantics=("parallel", "parallel"),
            vmem_limit_bytes=vmem_limit,
        ),
    )(a, w, b.reshape(1, N))


# ---------------------------------------------------------------------------
# Recurrence kernel: stacked GRU over a chunk of time steps per grid iteration.
# Layer-0 input gates (gi0) arrive precomputed; only h-dependent work is here.
# ---------------------------------------------------------------------------
def _make_gru_kernel(num_layers, num_steps, num_chunks, t_chunk, h_pad,
                     batch_major_out, mxu_dtype):
    masked = (num_chunks * t_chunk != num_steps)
    # Step index (within a chunk) from which a step can fall past the sequence
    # end (only possible in the last chunk); selects are emitted only there.
    tail_start = num_steps - (num_chunks - 1) * t_chunk

    def kernel(*refs):
        gi0_ref = refs[0]                 # (t_chunk, Bp, 3Hp) layer-0 input gates
        ctx_ref = refs[1]                 # (Bp, 3Hp) time-invariant context gates
        state_ref = refs[2]               # (L, Bp, Hp) initial hidden state
        idx = 3
        w_ih_refs, b_ih_refs = [], []
        for _ in range(num_layers - 1):   # input-to-hidden, layers >= 1
            w_ih_refs.append(refs[idx])
            b_ih_refs.append(refs[idx + 1])
            idx += 2
        w_hh_refs, b_hn_refs = [], []
        for _ in range(num_layers):       # hidden-to-hidden, all layers
            w_hh_refs.append(refs[idx])
            b_hn_refs.append(refs[idx + 1])
            idx += 2
        h_top_ref = refs[idx]             # top-layer h per step
        state_out_ref = refs[idx + 1]     # (L, Bp, Hp)
        h_scratch = refs[idx + 2]         # (L, Bp, Hp) persistent hidden state

        c = pl.program_id(0)
        Hp = h_pad

        @pl.when(c == 0)
        def _():
            h_scratch[...] = state_ref[...]

        # Hidden state lives in local values for the whole chunk; the VMEM
        # scratch is only touched at chunk boundaries.
        h = [h_scratch[l] for l in range(num_layers)]

        for i in range(t_chunk):
            # Layer-0 gates: precomputed embedding part + context part.  The
            # VPU add is free filler under the MXU-bound recurrence.
            gi = gi0_ref[i] + ctx_ref[...]
            h_below = None
            for l in range(num_layers):
                h_prev = h[l]
                if l > 0:
                    gi = (jnp.dot(h_below.astype(mxu_dtype),
                                  w_ih_refs[l - 1][...],
                                  preferred_element_type=jnp.float32)
                          + b_ih_refs[l - 1][...])
                gh = jnp.dot(h_prev.astype(mxu_dtype), w_hh_refs[l][...],
                             preferred_element_type=jnp.float32)
                # PyTorch GRU gate order (r, z, n); slices are 128-lane aligned.
                r = jax.nn.sigmoid(gi[:, :Hp] + gh[:, :Hp])
                z = jax.nn.sigmoid(gi[:, Hp:2 * Hp] + gh[:, Hp:2 * Hp])
                n = jnp.tanh(gi[:, 2 * Hp:] + r * (gh[:, 2 * Hp:]
                                                   + b_hn_refs[l][...]))
                h_new = (1.0 - z) * n + z * h_prev
                if masked and i >= tail_start:
                    valid = (c * t_chunk + i) < num_steps
                    h_new = jnp.where(valid, h_new, h_prev)
                h[l] = h_new
                h_below = h_new
            if batch_major_out:
                h_top_ref[:, i, :] = h_below     # (Bp, Hp) into batch-major out
            else:
                h_top_ref[i] = h_below           # time-major fallback

        for l in range(num_layers):
            h_scratch[l] = h[l]

        @pl.when(c == num_chunks - 1)
        def _():
            for l in range(num_layers):
                state_out_ref[l] = h[l]

    return kernel


# ---------------------------------------------------------------------------
# Wrapper: mirrors Decoder.forward
# ---------------------------------------------------------------------------
def decoder_forward(X_tokens, state, params, *, t_chunk=None,
                    matmul_dtype=jnp.float32):
    """X_tokens: (batch, num_steps) int32
       state:    (num_layers, batch, num_hiddens) f32
       returns (output (batch, num_steps, vocab), new_state (L, batch, H))."""
    f32 = jnp.float32
    emb_table = params["embedding"].astype(f32)      # (V, E)
    gru = params["gru"]
    num_layers = len(gru)
    B, S = X_tokens.shape
    V, E = emb_table.shape
    H = state.shape[-1]

    Bp = _round_up(B, 8)        # sublane-aligned batch
    Hp = _round_up(H, 128)      # lane-aligned hidden
    Vp = _round_up(V, 128)      # lane-aligned vocab

    # Time chunking: either the whole (short) sequence or a multiple of 8 so
    # the batch-major (Bp, t_chunk, Hp) output block obeys the (8,128) rule;
    # prefer chunk sizes that divide S so tail masking is not needed.
    if t_chunk is None:
        if S <= 16:
            t_chunk = S
        elif S % 16 == 0:
            t_chunk = 16
        else:
            t_chunk = 8
    t_chunk = max(1, min(int(t_chunk), S))
    Sp = _round_up(S, t_chunk)
    num_chunks = Sp // t_chunk

    # ---- weight prep: pad each gate segment to Hp, pre-fold r/z biases ------
    def pad_gate_rows(w):   # (3H, in) -> (3Hp, in), per-gate zero padding
        w3 = jnp.pad(w.reshape(3, H, w.shape[1]), ((0, 0), (0, Hp - H), (0, 0)))
        return w3.reshape(3 * Hp, w.shape[1])

    def pad_gate_vec(v):    # (3H,) -> (3Hp,)
        return jnp.pad(v.reshape(3, H), ((0, 0), (0, Hp - H))).reshape(3 * Hp)

    def pad_in_cols(w):     # (3Hp, in) -> (3Hp, Hp)
        return jnp.pad(w, ((0, 0), (0, Hp - w.shape[1])))

    w_dt = matmul_dtype
    weight_bytes = jnp.dtype(w_dt).itemsize
    w_ih_t, b_fold_all, w_hh_t, b_hn_all = [], [], [], []
    w0x_t = w0c = None
    for l, (w_ih, w_hh, b_ih, b_hh) in enumerate(gru):
        w_ih = w_ih.astype(f32)
        w_hh = w_hh.astype(f32)
        bi = pad_gate_vec(b_ih.astype(f32))
        bh = pad_gate_vec(b_hh.astype(f32))
        # r/z gates: b_ih + b_hh pre-summed; n gate keeps b_hh_n separate.
        b_fold = bi + jnp.concatenate([bh[:2 * Hp], jnp.zeros((Hp,), f32)])
        b_hn = bh[2 * Hp:].reshape(1, Hp)
        if l == 0:
            w0x_t = pad_gate_rows(w_ih[:, :E]).T.astype(w_dt)             # (E, 3Hp)
            w0c = pad_in_cols(pad_gate_rows(w_ih[:, E:]))                 # (3Hp, Hp)
            w_ih_t.append(None)     # layer-0 input matmul is hoisted out
        else:
            w_ih_t.append(pad_in_cols(pad_gate_rows(w_ih)).T.astype(w_dt))  # (Hp,3Hp)
        w_hh_t.append(pad_in_cols(pad_gate_rows(w_hh)).T.astype(w_dt))       # (Hp,3Hp)
        b_fold_all.append(b_fold)
        b_hn_all.append(b_hn)

    # ---- glue (plain JAX): embedding gather, time-major layout, padding -----
    X = jnp.transpose(emb_table[X_tokens], (1, 0, 2))            # (S, B, E)
    X = jnp.pad(X, ((0, Sp - S), (0, Bp - B), (0, 0)))           # (Sp, Bp, E)
    state_p = jnp.pad(state.astype(f32),
                      ((0, 0), (0, Bp - B), (0, Hp - H)))        # (L, Bp, Hp)

    # ---- hoisted layer-0 input projection: all Sp*Bp rows in one matmul -----
    gi0 = matmul_bias(X.reshape(Sp * Bp, E).astype(w_dt), w0x_t,
                      b_fold_all[0]).reshape(Sp, Bp, 3 * Hp)
    # time-invariant context gates, computed once; added in-kernel so the big
    # (Sp, Bp, 3Hp) tensor never takes an extra HBM round trip.
    ctx = state_p[-1] @ w0c.T                                    # (Bp, 3Hp)

    # ---- recurrence kernel ---------------------------------------------------
    def _const_index_map(rank):
        zero = (0,) * rank
        return lambda c: zero

    def run_recurrence(single_buffer, batch_major):
        def inv_spec(shape):
            idx = _const_index_map(len(shape))
            if single_buffer:
                return pl.BlockSpec(shape, idx, pipeline_mode=pl.Buffered(1))
            return pl.BlockSpec(shape, idx)

        inputs = [gi0, ctx, state_p]
        in_specs = [
            pl.BlockSpec((t_chunk, Bp, 3 * Hp), lambda c: (c, 0, 0)),
            inv_spec((Bp, 3 * Hp)),
            inv_spec((num_layers, Bp, Hp)),
        ]
        for l in range(1, num_layers):
            inputs += [w_ih_t[l], b_fold_all[l].reshape(1, 3 * Hp)]
            in_specs += [inv_spec((Hp, 3 * Hp)), inv_spec((1, 3 * Hp))]
        for l in range(num_layers):
            inputs += [w_hh_t[l], b_hn_all[l]]
            in_specs += [inv_spec((Hp, 3 * Hp)), inv_spec((1, Hp))]

        if batch_major:
            h_top_shape = (Bp, Sp, Hp)
            h_top_spec = pl.BlockSpec((Bp, t_chunk, Hp), lambda c: (0, c, 0))
        else:
            h_top_shape = (Sp, Bp, Hp)
            h_top_spec = pl.BlockSpec((t_chunk, Bp, Hp), lambda c: (c, 0, 0))

        # VMEM budget from the actual buffer sizes (weights single- or
        # double-buffered, gi0/h_top chunks double-buffered, plus scratch).
        wb = 1 if single_buffer else 2
        need = (wb * ((2 * num_layers - 1) * Hp * 3 * Hp * weight_bytes
                      + (num_layers - 1) * 3 * Hp * 4 + num_layers * Hp * 4
                      + Bp * 3 * Hp * 4
                      + num_layers * Bp * Hp * 4)
                + 2 * t_chunk * Bp * 3 * Hp * 4      # gi0 chunk (double-buffered)
                + 2 * t_chunk * Bp * Hp * 4          # h_top chunk
                + 2 * num_layers * Bp * Hp * 4       # state_out
                + num_layers * Bp * Hp * 4)          # scratch

        kernel = _make_gru_kernel(num_layers, S, num_chunks, t_chunk, Hp,
                                  batch_major, w_dt)
        return pl.pallas_call(
            kernel,
            out_shape=(
                jax.ShapeDtypeStruct(h_top_shape, f32),
                jax.ShapeDtypeStruct((num_layers, Bp, Hp), f32),
            ),
            grid_spec=pltpu.PrefetchScalarGridSpec(
                num_scalar_prefetch=0,
                grid=(num_chunks,),
                in_specs=in_specs,
                out_specs=[
                    h_top_spec,
                    pl.BlockSpec((num_layers, Bp, Hp), lambda c: (0, 0, 0)),
                ],
                scratch_shapes=[pltpu.VMEM((num_layers, Bp, Hp), f32)],
            ),
            compiler_params=pltpu.CompilerParams(
                dimension_semantics=("arbitrary",),   # sequential over time
                vmem_limit_bytes=_clamp_vmem(need),
            ),
        )(*inputs)

    # Prefer single-buffered time-invariant operands (halves their VMEM
    # footprint) and a batch-major h_top (removes an XLA HBM transpose before
    # the vocab head); fall back gracefully if this jax/Mosaic build rejects
    # either feature so the kernel always runs.
    last_err = None
    single_buffer = batch_major = False
    for single_buffer, batch_major in ((True, True), (False, True),
                                       (True, False), (False, False)):
        try:
            h_top, state_out = run_recurrence(single_buffer, batch_major)
            break
        except Exception as err:          # pragma: no cover - feature fallback
            last_err = err
    else:
        raise last_err

    # ---- batched dense vocab head (single tiled matmul over Bp*S rows) ------
    dense_w_t = jnp.pad(params["dense_w"].astype(f32),
                        ((0, Vp - V), (0, Hp - H))).T.astype(w_dt)   # (Hp, Vp)
    dense_b = jnp.pad(params["dense_b"].astype(f32), (0, Vp - V))
    if batch_major:
        h_bs = h_top[:, :S, :].reshape(Bp * S, Hp)       # no transpose needed
    else:
        # TODO(synk): fallback path keeps one (S,Bp,Hp) XLA transpose.
        h_bs = jnp.transpose(h_top[:S], (1, 0, 2)).reshape(Bp * S, Hp)
    logits = matmul_bias(h_bs.astype(w_dt), dense_w_t, dense_b)      # (Bp*S, Vp)
    output = logits.reshape(Bp, S, Vp)[:B, :, :V]                    # (B, S, V)
    new_state = state_out[:, :B, :H]
    return output, new_state


# ---------------- pure-JAX reference (mirrors torch.nn.GRU semantics) --------
def decoder_reference(X_tokens, state, params):
    emb_table = params["embedding"]
    H = state.shape[-1]
    B, S = X_tokens.shape
    X = jnp.transpose(emb_table[X_tokens], (1, 0, 2))          # (S, B, E)
    context = jnp.broadcast_to(state[-1][None, :, :], (S, B, H))
    x = jnp.concatenate([X, context], axis=2)                   # (S, B, E+H)

    h = [state[l] for l in range(state.shape[0])]
    outs = []
    for t in range(S):
        inp = x[t]
        for l, (w_ih, w_hh, b_ih, b_hh) in enumerate(params["gru"]):
            gi = inp @ w_ih.T + b_ih
            gh = h[l] @ w_hh.T + b_hh
            i_r, i_z, i_n = gi[:, :H], gi[:, H:2 * H], gi[:, 2 * H:]
            h_r, h_z, h_n = gh[:, :H], gh[:, H:2 * H], gh[:, 2 * H:]
            r = jax.nn.sigmoid(i_r + h_r)
            z = jax.nn.sigmoid(i_z + h_z)
            n = jnp.tanh(i_n + r * h_n)
            h[l] = (1.0 - z) * n + z * h[l]
            inp = h[l]
        outs.append(inp @ params["dense_w"].T + params["dense_b"])
    out = jnp.stack(outs, axis=0)                               # (S, B, V)
    return jnp.transpose(out, (1, 0, 2)), jnp.stack(h, axis=0)


if __name__ == "__main__":
    vocab_size, embed_size, num_hiddens, num_layers = 32, 16, 32, 2
    batch, num_steps = 4, 8

    key = jax.random.PRNGKey(0)
    keys = jax.random.split(key, 16)
    ki = iter(keys)

    def init(k, shape, scale=0.1):
        return jax.random.normal(k, shape, dtype=jnp.float32) * scale

    gru_params = []
    for l in range(num_layers):
        in_dim = (embed_size + num_hiddens) if l == 0 else num_hiddens
        gru_params.append((
            init(next(ki), (3 * num_hiddens, in_dim)),           # weight_ih_l{l}
            init(next(ki), (3 * num_hiddens, num_hiddens)),      # weight_hh_l{l}
            init(next(ki), (3 * num_hiddens,)),                  # bias_ih_l{l}
            init(next(ki), (3 * num_hiddens,)),                  # bias_hh_l{l}
        ))

    params = {
        "embedding": init(next(ki), (vocab_size, embed_size), scale=1.0),
        "gru": gru_params,
        "dense_w": init(next(ki), (vocab_size, num_hiddens)),
        "dense_b": init(next(ki), (vocab_size,)),
    }

    X_tokens = jax.random.randint(next(ki), (batch, num_steps), 0, vocab_size,
                                  dtype=jnp.int32)
    state0 = init(next(ki), (num_layers, batch, num_hiddens), scale=1.0)

    out, new_state = decoder_forward(X_tokens, state0, params)
    out = jax.block_until_ready(out)
    new_state = jax.block_until_ready(new_state)

    ref_out, ref_state = decoder_reference(X_tokens, state0, params)
    assert out.shape == (batch, num_steps, vocab_size)
    assert new_state.shape == (num_layers, batch, num_hiddens)
    assert jnp.allclose(out, ref_out, atol=1e-4, rtol=1e-4)
    assert jnp.allclose(new_state, ref_state, atol=1e-4, rtol=1e-4)

    print("KERNEL_OK")
</pallas_src>

<mosaic_0001>
module attributes {stable_mosaic.version = 11 : i64} {
  func.func @_matmul_bias_kernel(%arg0: i32, %arg1: i32, %arg2: memref<64x16xf32, #tpu.memory_space<vmem>>, %arg3: memref<16x128xf32, #tpu.memory_space<vmem>>, %arg4: memref<1x128xf32, #tpu.memory_space<vmem>>, %arg5: memref<64x128xf32, #tpu.memory_space<vmem>>) attributes {dimension_semantics = [#tpu.dimension_semantics<parallel>, #tpu.dimension_semantics<parallel>], iteration_bounds = array<i64: 1, 3>, scalar_prefetch = 0 : i64, scratch_operands = 0 : i64, tpu.core_type = #tpu.core_type<tc>, window_params = [{transform_indices = @transform_0, window_bounds = array<i64: 64, 16>}, {transform_indices = @transform_1, window_bounds = array<i64: 16, 128>}, {transform_indices = @transform_2, window_bounds = array<i64: 1, 128>}, {transform_indices = @transform_3, window_bounds = array<i64: 64, 128>}]} {
    %c0 = arith.constant 0 : index
    %c0_0 = arith.constant 0 : index
    %0 = vector.load %arg2[%c0, %c0_0] : memref<64x16xf32, #tpu.memory_space<vmem>>, vector<64x16xf32>
    %c0_1 = arith.constant 0 : index
    %c0_2 = arith.constant 0 : index
    %1 = vector.load %arg3[%c0_1, %c0_2] : memref<16x128xf32, #tpu.memory_space<vmem>>, vector<16x128xf32>
    %cst = arith.constant dense<0.000000e+00> : vector<64x128xf32>
    %2 = tpu.matmul %0, %1, %cst {dimension_numbers = #tpu.dot_dimension_numbers<[1], [0], [0], [1], [0, 0, 1, 1], [], []>} : vector<64x16xf32>, vector<16x128xf32>, vector<64x128xf32> -> vector<64x128xf32>
    %c0_3 = arith.constant 0 : index
    %c0_4 = arith.constant 0 : index
    %3 = vector.load %arg4[%c0_3, %c0_4] : memref<1x128xf32, #tpu.memory_space<vmem>>, vector<1x128xf32>
    %4 = vector.broadcast %3 : vector<1x128xf32> to vector<64x128xf32>
    %5 = arith.addf %2, %4 : vector<64x128xf32>
    %c0_5 = arith.constant 0 : index
    %c0_6 = arith.constant 0 : index
    %6 = vector.load %arg5[%c0_5, %c0_6] : memref<64x128xf32, #tpu.memory_space<vmem>>, vector<64x128xf32>
    tpu.vector_store %arg5[%c0_5, %c0_6], %5 {strides = array<i32>} : memref<64x128xf32, #tpu.memory_space<vmem>>, vector<64x128xf32>,
    return
  }
  func.func @transform_0(%arg0: i32, %arg1: i32) -> (i32, i32) {
    %c0_i32 = arith.constant 0 : i32
    %c0_i32_0 = arith.constant 0 : i32
    return %arg0, %c0_i32 : i32, i32
  }
  func.func @transform_1(%arg0: i32, %arg1: i32) -> (i32, i32) {
    %c0_i32 = arith.constant 0 : i32
    %c0_i32_0 = arith.constant 0 : i32
    return %c0_i32, %arg1 : i32, i32
  }
  func.func @transform_2(%arg0: i32, %arg1: i32) -> (i32, i32) {
    %c0_i32 = arith.constant 0 : i32
    %c0_i32_0 = arith.constant 0 : i32
    return %c0_i32, %arg1 : i32, i32
  }
  func.func @transform_3(%arg0: i32, %arg1: i32) -> (i32, i32) {
    %c0_i32 = arith.constant 0 : i32
    return %arg0, %arg1 : i32, i32
  }
}

</mosaic_0001>

<llo_original>
// kernel: tpu_custom_call.1
$region0: #{tpu_custom_call.1}
  #allocation0 [shape = 'u32[]', space=smem, size = 0x4, offset = 0x4, fixed_abs, tag = 'smem constant byte address 0x4 - core index']
  #allocation1 [shape = 'u32[144,128]{1,0:T(1,128)}', space=vmem, size = 0x12000, scoped, tag = 'internal scratch']
  %s0 = inlined_call_operand.vmem [shape: f32[64,16], index: 0, kind: input, shape index: {}]
  %s1 = inlined_call_operand.vmem [shape: f32[16,384], index: 1, kind: input, shape index: {}]
  %s2 = inlined_call_operand.vmem [shape: f32[1,384], index: 2, kind: input, shape index: {}]
  %s3 = inlined_call_operand.hbm [shape: f32[64,384], index: 3, kind: output, shape index: {}]
  %s4 = sld [smem:[#allocation0]]
  $region83: #{tpu_custom_call.1} parent=0
    _
  %s6 = ssub.s32 1, %s4
  %s7 = scalar_select 0, %s6, %s4
  $region1: #{tpu_custom_call.1} parent=0
    #allocation2 [shape = 'u8[16384]{0}', space=vmem, size = 0x4000, scoped, tag = 'input window, operand 1']
    #allocation3 [shape = 'u8[65536]{0}', space=vmem, size = 0x10000, scoped, tag = 'output window, operand 0']
    #allocation4 [shape = 's32[2]{0}', space=sflag, size = 0x8, scoped, tag = 'scoped memory for tpu_custom_call.1']
    %8 = vsyncpa [#allocation4], 0
    %s9 = scalar_lea.sflag [#allocation4], 1
    %10 = vsyncpa %s9, 0
    loop: start=0, step=1, limit=5
    $region2: #{tpu_custom_call.1} parent=1 // loop_pre_header
      _
    $region3: #{tpu_custom_call.1} parent=1 // loop_header
      %s12 = sphi 0, %s16
      %p13 = scmp.ge.s32.totalorder %s12, 5
      %s19 = sphi 0, %s31
      %s20 = sphi 0, %s27
      %s21 = sphi 0, %s19
      %s22 = sphi 0, %s20
      %s23 = sphi 0, %s21
      %s24 = sphi 0, %s22
      %s34 = sphi 0, %s36
      %s37 = sphi 0, %s34
      %s38 = sphi 0, %s37
      %s54 = sphi 0, %s38
      %s60 = sphi 0, %s62
      %s63 = sphi 0, %s60
      %s64 = sphi 0, %s63
      %s80 = sphi 0, %s64
      %s86 = sphi 0, %s88
      %s89 = sphi 0, %s86
      %s90 = sphi 0, %s89
      %s106 = sphi 0, %s90
      %s114 = sphi 0, %s116
      %s117 = sphi 0, %s114
      %s118 = sphi 0, %s117
      %s134 = sphi 0, %s118
    $region4: #{tpu_custom_call.1} parent=1 // loop_header_branch
      %15 = sbr.rel (%p13) target = $region8
    $region5: #{tpu_custom_call.1} parent=1 // loop_body
      %s17 = ssub.s32 %s12, 1
      %s18 = ssub.s32 %s12, 2
      %s25 = sadd.s32 1, %s20
      %p26 = scmp.ge.s32.totalorder %s25, 3
      %s27 = scalar_select %p26, 0, %s25
      %s28 = sadd.s32 1, %s19
      %s29 = scalar_select %p26, %s28, %s19
      %p30 = scmp.ge.s32.totalorder %s29, 1
      %s31 = scalar_select %p30, 0, %s29
      %s32 = ssub.s32 %s19, %s31
      %p33 = scmp.eq.s32.totalorder %s32, 0
      %s35 = sadd.s32 %s34, 1
      %s36 = scalar_select %p33, %s34, %s35
      %p39 = pneg %p33
      %p40 = scmp.eq.s32.totalorder %s12, 2
      %p41 = por %p39, %p40
      %p42 = scmp.ne.s32.totalorder %s34, %s37
      %p43 = scmp.eq.s32.totalorder %s12, 0
      %p44 = por %p42, %p43
      %p45 = scmp.ne.s32.totalorder %s34, %s37
      %p46 = scmp.eq.s32.totalorder %s17, 2
      %p47 = por %p45, %p46
      %p48 = scmp.ne.s32.totalorder %s37, %s38
      %p49 = scmp.eq.s32.totalorder %s17, 0
      %p50 = por %p48, %p49
      %p51 = scmp.ne.s32.totalorder %s37, %s38
      %p52 = scmp.eq.s32.totalorder %s18, 2
      %p53 = por %p51, %p52
      %p55 = scmp.ne.s32.totalorder %s38, %s54
      %p56 = scmp.eq.s32.totalorder %s18, 0
      %p57 = por %p55, %p56
      %s58 = ssub.s32 %s20, %s27
      %p59 = scmp.eq.s32.totalorder %s58, 0
      %s61 = sadd.s32 %s60, 1
      %s62 = scalar_select %p59, %s60, %s61
      %p65 = pneg %p59
      %p66 = scmp.eq.s32.totalorder %s12, 2
      %p67 = por %p65, %p66
      %p68 = scmp.ne.s32.totalorder %s60, %s63
      %p69 = scmp.eq.s32.totalorder %s12, 0
      %p70 = por %p68, %p69
      %p71 = scmp.ne.s32.totalorder %s60, %s63
      %p72 = scmp.eq.s32.totalorder %s17, 2
      %p73 = por %p71, %p72
      %p74 = scmp.ne.s32.totalorder %s63, %s64
      %p75 = scmp.eq.s32.totalorder %s17, 0
      %p76 = por %p74, %p75
      %p77 = scmp.ne.s32.totalorder %s63, %s64
      %p78 = scmp.eq.s32.totalorder %s18, 2
      %p79 = por %p77, %p78
      %p81 = scmp.ne.s32.totalorder %s64, %s80
      %p82 = scmp.eq.s32.totalorder %s18, 0
      %p83 = por %p81, %p82
      %s84 = ssub.s32 %s20, %s27
      %p85 = scmp.eq.s32.totalorder %s84, 0
      %s87 = sadd.s32 %s86, 1
      %s88 = scalar_select %p85, %s86, %s87
      %p91 = pneg %p85
      %p92 = scmp.eq.s32.totalorder %s12, 2
      %p93 = por %p91, %p92
      %p94 = scmp.ne.s32.totalorder %s86, %s89
      %p95 = scmp.eq.s32.totalorder %s12, 0
      %p96 = por %p94, %p95
      %p97 = scmp.ne.s32.totalorder %s86, %s89
      %p98 = scmp.eq.s32.totalorder %s17, 2
      %p99 = por %p97, %p98
      %p100 = scmp.ne.s32.totalorder %s89, %s90
      %p101 = scmp.eq.s32.totalorder %s17, 0
      %p102 = por %p100, %p101
      %p103 = scmp.ne.s32.totalorder %s89, %s90
      %p104 = scmp.eq.s32.totalorder %s18, 2
      %p105 = por %p103, %p104
      %p107 = scmp.ne.s32.totalorder %s90, %s106
      %p108 = scmp.eq.s32.totalorder %s18, 0
      %p109 = por %p107, %p108
      %s110 = ssub.s32 %s19, %s31
      %s111 = ssub.s32 %s20, %s27
      %s112 = sor.u32 %s110, %s111
      %p113 = scmp.eq.s32.totalorder %s112, 0
      %s115 = sadd.s32 %s114, 1
      %s116 = scalar_select %p113, %s114, %s115
      %p119 = pneg %p113
      %p120 = scmp.eq.s32.totalorder %s12, 2
      %p121 = por %p119, %p120
      %p122 = scmp.ne.s32.totalorder %s114, %s117
      %p123 = scmp.eq.s32.totalorder %s12, 0
      %p124 = por %p122, %p123
      %p125 = scmp.ne.s32.totalorder %s114, %s117
      %p126 = scmp.eq.s32.totalorder %s17, 2
      %p127 = por %p125, %p126
      %p128 = scmp.ne.s32.totalorder %s117, %s118
      %p129 = scmp.eq.s32.totalorder %s17, 0
      %p130 = por %p128, %p129
      %p131 = scmp.ne.s32.totalorder %s117, %s118
      %p132 = scmp.eq.s32.totalorder %s18, 2
      %p133 = por %p131, %p132
      %p135 = scmp.ne.s32.totalorder %s118, %s134
      %p136 = scmp.eq.s32.totalorder %s18, 0
      %p137 = por %p135, %p136
      %p138 = scmp.le.s32.totalorder 1, %s12
      %p139 = scmp.lt.s32.totalorder %s12, 4
      %p140 = pnand %p138, %p139
      %p141 = pneg %p140
      // Predicated region
      $region9: #{tpu_custom_call.1} parent=5 // pred_check
        _
      $region10: #{tpu_custom_call.1} parent=5 // pred_check_branch
        %143 = sbr.rel (%p140) target = $region12
      $region11: #{tpu_custom_call.1} parent=5 // pred_region
        %s144 = ssub.s32 %s12, 1
        // Predicated region
        $region13: #{tpu_custom_call.1} parent=11 // pred_check
          %p145 = pneg %p50
        $region14: #{tpu_custom_call.1} parent=11 // pred_check_branch
          %147 = sbr.rel (%p145) target = $region16
        $region15: #{tpu_custom_call.1} parent=11 // pred_region
          %s148 = smul.u32 8, %s21
          %p149 = scmp.lt.s32.totalorder %s148, 7
          %s150 = scalar_select %p149, %s148, 7
          %s151 = smul.addr %s150, 8
          %s152 = scalar_lea.vmem %s0, %s151
          %s153 = smul.u32 8, %s21
        $region16: #{tpu_custom_call.1} parent=11 // pred_fallthru
          _
      $region12: #{tpu_custom_call.1} parent=5 // pred_fallthru
        _
      %p154 = scmp.lt.s32.totalorder %s12, 3
      // Predicated region
      $region17: #{tpu_custom_call.1} parent=5 // pred_check
        %p155 = pneg %p154
      $region18: #{tpu_custom_call.1} parent=5 // pred_check_branch
        %157 = sbr.rel (%p155) target = $region20
      $region19: #{tpu_custom_call.1} parent=5 // pred_region
        // Predicated region
        $region21: #{tpu_custom_call.1} parent=19 // pred_check
          %p158 = pneg %p70
        $region22: #{tpu_custom_call.1} parent=19 // pred_check_branch
          %160 = sbr.rel (%p158) target = $region24
        $region23: #{tpu_custom_call.1} parent=19 // pred_region
          %s161 = sand.u32 %s60, 1
          %s162 = sand.u32 %s60, 1
          %s163 = smul.addr %s162, 16
          %s164 = scalar_lea.vmem [#allocation2], %s163
          %s165 = smul.addr %s20, 8
          %s166 = scalar_lea.vmem %s1, %s165
          // Predicated region
          $region25: #{tpu_custom_call.1} parent=23 // pred_check
            _
          $region26: #{tpu_custom_call.1} parent=23 // pred_check_branch
            %168 = sbr.rel (0) target = $region28
          $region27: #{tpu_custom_call.1} parent=23 // pred_region
            // Predicated region
            $region29: #{tpu_custom_call.1} parent=27 // pred_check
              _
            $region30: #{tpu_custom_call.1} parent=27 // pred_check_branch
              %170 = sbr.rel (0) target = $region32
            $region31: #{tpu_custom_call.1} parent=27 // pred_region
              // Predicated region
              $region44: #{tpu_custom_call.1} parent=31 // pred_check
                _
              $region45: #{tpu_custom_call.1} parent=31 // pred_check_branch
                %188 = sbr.rel (0) target = $region47
              $region46: #{tpu_custom_call.1} parent=31 // pred_region
                loop: start=0, step=1, limit=1
                $region48: #{tpu_custom_call.1} parent=46 // loop_pre_header
                  _
                $region49: #{tpu_custom_call.1} parent=46 // loop_header
                  %s190 = sphi 0, %s194
                  %p191 = scmp.ge.s32.totalorder %s190, 1
                  %s195 = sphi %s166, %s166
                  %s196 = sphi %s164, %s164
                $region50: #{tpu_custom_call.1} parent=46 // loop_header_branch
                  %193 = sbr.rel (%p191) target = $region54
                $region51: #{tpu_custom_call.1} parent=46 // loop_body
                  %v197 = vld [vmem:[%s195] sm:$0xff]
                  %198 = vst [vmem:[%s196] sm:$0xff] %v197
                  %v199 = vld [vmem:[%s195 + $0x18] sm:$0xff]
                  %200 = vst [vmem:[%s196 + $0x8] sm:$0xff] %v199
                $region52: #{tpu_custom_call.1} parent=46 // loop_footer
                  %s194 = sadd.s32 1, %s190
                $region53: #{tpu_custom_call.1} parent=46 // loop_footer_branch
                  %189 = sbr.rel target = $region49
                $region54: #{tpu_custom_call.1} parent=46 // loop_exit
                  _
              $region47: #{tpu_custom_call.1} parent=31 // pred_fallthru
                _
              // Predicated region
              $region55: #{tpu_custom_call.1} parent=31 // pred_check
                _
              $region56: #{tpu_custom_call.1} parent=31 // pred_check_branch
                %202 = sbr.rel target = $region58
              $region57: #{tpu_custom_call.1} parent=31 // pred_region
                _
              $region58: #{tpu_custom_call.1} parent=31 // pred_fallthru
                _
            $region32: #{tpu_custom_call.1} parent=27 // pred_fallthru
              _
            // Predicated region
            $region33: #{tpu_custom_call.1} parent=27 // pred_check
              _
            $region34: #{tpu_custom_call.1} parent=27 // pred_check_branch
              %172 = sbr.rel target = $region36
            $region35: #{tpu_custom_call.1} parent=27 // pred_region
              %s174 = ssub.s32 256, 1
              loop: start=0, step=1, limit=1
              $region37: #{tpu_custom_call.1} parent=35 // loop_pre_header
                _
              $region38: #{tpu_custom_call.1} parent=35 // loop_header
                %s176 = sphi 0, %s180
                %p177 = scmp.ge.s32.totalorder %s176, 1
                %s181 = sphi %s166, %s166
                %s182 = sphi %s164, %s164
              $region39: #{tpu_custom_call.1} parent=35 // loop_header_branch
                %179 = sbr.rel (%p177) target = $region43
              $region40: #{tpu_custom_call.1} parent=35 // loop_body
                %v183 = vld [vmem:[%s181] sm:%s174]
                %184 = vst [vmem:[%s182] sm:%s174] %v183
                %v185 = vld [vmem:[%s181 + $0x18] sm:%s174]
                %186 = vst [vmem:[%s182 + $0x8] sm:%s174] %v185
              $region41: #{tpu_custom_call.1} parent=35 // loop_footer
                %s180 = sadd.s32 1, %s176
              $region42: #{tpu_custom_call.1} parent=35 // loop_footer_branch
                %175 = sbr.rel target = $region38
              $region43: #{tpu_custom_call.1} parent=35 // loop_exit
                _
            $region36: #{tpu_custom_call.1} parent=27 // pred_fallthru
              _
          $region28: #{tpu_custom_call.1} parent=23 // pred_fallthru
            _
          %203 = vnop
        $region24: #{tpu_custom_call.1} parent=19 // pred_fallthru
          _
        // Predicated region
        $region59: #{tpu_custom_call.1} parent=19 // pred_check
          %p204 = pneg %p96
        $region60: #{tpu_custom_call.1} parent=19 // pred_check_branch
          %206 = sbr.rel (%p204) target = $region62
        $region61: #{tpu_custom_call.1} parent=19 // pred_region
          %p207 = scmp.lt.s32.totalorder %s20, 2
          %s208 = scalar_select %p207, %s20, 2
          %s209 = scalar_lea.vmem %s2, %s208
        $region62: #{tpu_custom_call.1} parent=19 // pred_fallthru
          _
      $region20: #{tpu_custom_call.1} parent=5 // pred_fallthru
        _
      %p210 = scmp.le.s32.totalorder 1, %s12
      %p211 = scmp.lt.s32.totalorder %s12, 4
      %p212 = pnand %p210, %p211
      %p213 = pneg %p212
      // Predicated region
      $region63: #{tpu_custom_call.1} parent=5 // pred_check
        _
      $region64: #{tpu_custom_call.1} parent=5 // pred_check_branch
        %215 = sbr.rel (%p212) target = $region66
      $region65: #{tpu_custom_call.1} parent=5 // pred_region
        %s216 = ssub.s32 %s12, 1
        %s217 = sand.u32 %s63, 1
        %s218 = sand.u32 %s63, 1
        %s219 = smul.addr %s218, 16
        %s220 = scalar_lea.vmem [#allocation2], %s219
        // Predicated region
        $region67: #{tpu_custom_call.1} parent=65 // pred_check
          %p221 = pneg %p76
        $region68: #{tpu_custom_call.1} parent=65 // pred_check_branch
          %223 = sbr.rel (%p221) target = $region70
        $region69: #{tpu_custom_call.1} parent=65 // pred_region
          _
        $region70: #{tpu_custom_call.1} parent=65 // pred_fallthru
          _
        %s224 = smul.u32 8, %s21
        %p225 = scmp.lt.s32.totalorder %s224, 7
        %s226 = scalar_select %p225, %s224, 7
        %s227 = smul.addr %s226, 8
        %s228 = scalar_lea.vmem %s0, %s227
        %p229 = pneg %p50
        %p230 = pneg %p47
        %s231 = sand.u32 %s63, 1
        %s232 = sand.u32 %s63, 1
        %s233 = smul.addr %s232, 16
        %s234 = scalar_lea.vmem [#allocation2], %s233
        %p235 = pneg %p76
        %p236 = pneg %p73
        %p237 = scmp.lt.s32.totalorder %s22, 2
        %s238 = scalar_select %p237, %s22, 2
        %s239 = scalar_lea.vmem %s2, %s238
        %p240 = pneg %p102
        %p241 = pneg %p99
        %p242 = pneg %p130
        %p243 = pneg %p127
        %s244 = sand.u32 %s117, 1
        %s245 = scalar_lea.sflag [#allocation4], %s244
        %s246 = sand.u32 %s117, 1
        %s247 = smul.addr %s246, 64
        %s248 = scalar_lea.vmem [#allocation3], %s247
        %s249 = smul.u32 8, %s21
        %p250 = scmp.lt.s32.totalorder %s249, 7
        %s251 = scalar_select %p250, %s249, 7
        %s252 = smul.addr %s251, 8
        %s253 = scalar_lea.vmem %s0, %s252
        %s254 = smul.u32 8, %s21
        %p255 = scmp.lt.s32.totalorder %s22, 2
        %s256 = scalar_select %p255, %s22, 2
        %s257 = scalar_lea.vmem %s2, %s256
        %s258 = smul.u32 8, %s21
        %v259 = vld [vmem:[%s253] sm:$0xff]
        %v260 = vld [vmem:[%s253 + $0x8] sm:$0xff]
        %v261 = vld [vmem:[%s253 + $0x10] sm:$0xff]
        %v262 = vld [vmem:[%s253 + $0x18] sm:$0xff]
        %v263 = vld [vmem:[%s253 + $0x20] sm:$0xff]
        %v264 = vld [vmem:[%s253 + $0x28] sm:$0xff]
        %v265 = vld [vmem:[%s253 + $0x30] sm:$0xff]
        %v266 = vld [vmem:[%s253 + $0x38] sm:$0xff]
        %v267 = vld [vmem:[%s220] sm:$0xff]
        %v268 = vld [vmem:[%s220 + $0x8] sm:$0xff]
        %v269 = vld [vmem:[%s257] sm:$0x1]
        %v271 = vlaneseq
        %v272 = vshrl.u32 %v271, 7
        %v273 = vsub.s32 0, %v272
        %v274 = vrot.slane %v269, %v273
        %vm276 = vcmask 130048
        %v278 = vsel %vm276, %v259, 0
        %v281 = vsel %vm276, %v260, 0
        %v284 = vsel %vm276, %v261, 0
        %v287 = vsel %vm276, %v262, 0
        %v290 = vsel %vm276, %v263, 0
        %v293 = vsel %vm276, %v264, 0
        %v296 = vsel %vm276, %v265, 0
        %v299 = vsel %vm276, %v266, 0
        %301 = vmatprep.subr.mxu0 0.0
        %302 = vmatpush1.msra.mxu0 0.0
        %303 = vmatprep.subr.mxu0 0.0
        %304 = vmatpush1.msra.mxu0 0.0
        %305 = vmatprep.subr.mxu0 0.0
        %306 = vmatpush1.msra.mxu0 0.0
        %307 = vmatprep.subr.mxu0 0.0
        %308 = vmatpush1.msra.mxu0 0.0
        %309 = vmatprep.subr.mxu0 0.0
        %310 = vmatpush1.msra.mxu0 0.0
        %311 = vmatprep.subr.mxu0 0.0
        %312 = vmatpush1.msra.mxu0 0.0
        %313 = vmatprep.subr.mxu0 0.0
        %314 = vmatpush1.msra.mxu0 0.0
        %315 = vmatprep.subr.mxu0 0.0
        %316 = vmatpush1.msra.mxu0 0.0
        %317 = vmatprep.subr.mxu0 0.0
        %318 = vmatpush1.msra.mxu0 0.0
        %319 = vmatprep.subr.mxu0 0.0
        %320 = vmatpush1.msra.mxu0 0.0
        %321 = vmatprep.subr.mxu0 0.0
        %322 = vmatpush1.msra.mxu0 0.0
        %323 = vmatprep.subr.mxu0 0.0
        %324 = vmatpush1.msra.mxu0 0.0
        %325 = vmatprep.subr.mxu0 0.0
        %326 = vmatpush1.msra.mxu0 0.0
        %327 = vmatprep.subr.mxu0 0.0
        %328 = vmatpush1.msra.mxu0 0.0
        %329 = vmatprep.subr.mxu0 0.0
        %330 = vmatpush1.msra.mxu0 %v268
        %331 = vmatprep.subr.mxu0 0.0
        %332 = vmatpush1.msra.mxu0 %v267
        %333 = vmatprep.subr.mxu0 0.0
        %334 = vmatpush2.msra.mxu0 0.0
        %335 = vmatprep.subr.mxu0 0.0
        %336 = vmatpush2.msra.mxu0 0.0
        %337 = vmatprep.subr.mxu0 0.0
        %338 = vmatpush2.msra.mxu0 0.0
        %339 = vmatprep.subr.mxu0 0.0
        %340 = vmatpush2.msra.mxu0 0.0
        %341 = vmatprep.subr.mxu0 0.0
        %342 = vmatpush2.msra.mxu0 0.0
        %343 = vmatprep.subr.mxu0 0.0
        %344 = vmatpush2.msra.mxu0 0.0
        %345 = vmatprep.subr.mxu0 0.0
        %346 = vmatpush2.msra.mxu0 0.0
        %347 = vmatprep.subr.mxu0 0.0
        %348 = vmatpush2.msra.mxu0 0.0
        %349 = vmatprep.subr.mxu0 0.0
        %350 = vmatpush2.msra.mxu0 0.0
        %351 = vmatprep.subr.mxu0 0.0
        %352 = vmatpush2.msra.mxu0 0.0
        %353 = vmatprep.subr.mxu0 0.0
        %354 = vmatpush2.msra.mxu0 0.0
        %355 = vmatprep.subr.mxu0 0.0
        %356 = vmatpush2.msra.mxu0 0.0
        %357 = vmatprep.subr.mxu0 0.0
        %358 = vmatpush2.msra.mxu0 0.0
        %359 = vmatprep.subr.mxu0 0.0
        %360 = vmatpush2.msra.mxu0 0.0
        %361 = vmatprep.subr.mxu0 0.0
        %362 = vmatpush2.msra.mxu0 0.0
        %363 = vmatprep.subr.mxu0 0.0
        %364 = vmatpush2.msra.mxu0 0.0
        %365 = vmatprep.mubr.f32.mxu0 0.0
        %366 = vmatmul.mubr.f32.gmra.mxu0 %v278
        %v367 = vpop.f32.mrf.mxu0
        %v368 = vadd.f32 %v274, %v367
        %v369 = vpop.f32.mrf.mxu0
        %370 = vmatprep.mubr.f32.mxu0 0.0
        %371 = vmatmul.mubr.f32.gmra.mxu0 %v281
        %v372 = vpop.f32.mrf.mxu0
        %v373 = vadd.f32 %v274, %v372
        %v374 = vpop.f32.mrf.mxu0
        %375 = vmatprep.mubr.f32.mxu0 0.0
        %376 = vmatmul.mubr.f32.gmra.mxu0 %v284
        %v377 = vpop.f32.mrf.mxu0
        %v378 = vadd.f32 %v274, %v377
        %v379 = vpop.f32.mrf.mxu0
        %380 = vmatprep.mubr.f32.mxu0 0.0
        %381 = vmatmul.mubr.f32.gmra.mxu0 %v287
        %v382 = vpop.f32.mrf.mxu0
        %v383 = vadd.f32 %v274, %v382
        %v384 = vpop.f32.mrf.mxu0
        %385 = vmatprep.mubr.f32.mxu0 0.0
        %386 = vmatmul.mubr.f32.gmra.mxu0 %v290
        %v387 = vpop.f32.mrf.mxu0
        %v388 = vadd.f32 %v274, %v387
        %v389 = vpop.f32.mrf.mxu0
        %390 = vmatprep.mubr.f32.mxu0 0.0
        %391 = vmatmul.mubr.f32.gmra.mxu0 %v293
        %v392 = vpop.f32.mrf.mxu0
        %v393 = vadd.f32 %v274, %v392
        %v394 = vpop.f32.mrf.mxu0
        %395 = vmatprep.mubr.f32.mxu0 0.0
        %396 = vmatmul.mubr.f32.gmra.mxu0 %v296
        %v397 = vpop.f32.mrf.mxu0
        %v398 = vadd.f32 %v274, %v397
        %v399 = vpop.f32.mrf.mxu0
        %400 = vmatprep.mubr.f32.mxu0 0.0
        %401 = vmatmul.mubr.f32.gmra.mxu0 %v299
        %v402 = vpop.f32.mrf.mxu0
        %v403 = vadd.f32 %v274, %v402
        %v404 = vpop.f32.mrf.mxu0
        %405 = vdwg.mxu0
        %406 = vst [vmem:[%s248] sm:$0xff] %v368
        %407 = vst [vmem:[%s248 + $0x8] sm:$0xff] %v373
        %408 = vst [vmem:[%s248 + $0x10] sm:$0xff] %v378
        %409 = vst [vmem:[%s248 + $0x18] sm:$0xff] %v383
        %410 = vst [vmem:[%s248 + $0x20] sm:$0xff] %v388
        %411 = vst [vmem:[%s248 + $0x28] sm:$0xff] %v393
        %412 = vst [vmem:[%s248 + $0x30] sm:$0xff] %v398
        %413 = vst [vmem:[%s248 + $0x38] sm:$0xff] %v403
        %s414 = sand.u32 %s117, 1
        %s415 = scalar_lea.sflag [#allocation4], %s414
        %s416 = sand.u32 %s117, 1
        %s417 = smul.addr %s416, 64
        %s418 = scalar_lea.vmem [#allocation3], %s417
        // Predicated region
        $region71: #{tpu_custom_call.1} parent=65 // pred_check
          %p419 = pneg %p127
        $region72: #{tpu_custom_call.1} parent=65 // pred_check_branch
          %421 = sbr.rel (%p419) target = $region74
        $region73: #{tpu_custom_call.1} parent=65 // pred_region
          %s422 = smul.u32 8, %s21
          %s424 = ssub.s32 1024, 1024
          %425 = vsyncadd %s415, %s424
          %s426 = smul.addr %s422, 3
          %s427 = sadd.s32 %s22, %s426
          %s428 = smul.addr %s427, 128
          %s429 = scalar_lea.hbm %s3, %s428
          %s430 = sshll.u32 %s418, 4
          %s431 = int_to_ptr.vmem [resolvable:$true] %s430
          %436 = dma.vmem_to_hbm [thread:$0]  %s431, 1024, %s429, %s415, 128, 384, 8
        $region74: #{tpu_custom_call.1} parent=65 // pred_fallthru
          _
      $region66: #{tpu_custom_call.1} parent=5 // pred_fallthru
        _
      %p437 = scmp.le.s32.totalorder 2, %s12
      // Predicated region
      $region75: #{tpu_custom_call.1} parent=5 // pred_check
        %p438 = pneg %p437
      $region76: #{tpu_custom_call.1} parent=5 // pred_check_branch
        %440 = sbr.rel (%p438) target = $region78
      $region77: #{tpu_custom_call.1} parent=5 // pred_region
        %s441 = ssub.s32 %s12, 2
        // Predicated region
        $region79: #{tpu_custom_call.1} parent=77 // pred_check
          %p442 = pneg %p133
        $region80: #{tpu_custom_call.1} parent=77 // pred_check_branch
          %444 = sbr.rel (%p442) target = $region82
        $region81: #{tpu_custom_call.1} parent=77 // pred_region
          %s445 = sand.u32 %s118, 1
          %s446 = scalar_lea.sflag [#allocation4], %s445
          %s447 = sand.u32 %s118, 1
          %s448 = smul.addr %s447, 64
          %s449 = scalar_lea.vmem [#allocation3], %s448
          %450 = dma.done %s446, 1024
        $region82: #{tpu_custom_call.1} parent=77 // pred_fallthru
          _
      $region78: #{tpu_custom_call.1} parent=5 // pred_fallthru
        _
    $region6: #{tpu_custom_call.1} parent=1 // loop_footer
      %s16 = sadd.s32 1, %s12
    $region7: #{tpu_custom_call.1} parent=1 // loop_footer_branch
      %11 = sbr.rel target = $region3
    $region8: #{tpu_custom_call.1} parent=1 // loop_exit
      _
    %451 = vsyncpa [#allocation4], 1
    %s452 = scalar_lea.sflag [#allocation4], 1
    %453 = vsyncpa %s452, 1

</llo_original>
